<compile_context>
chip_gen: v5e
topology: v5e:2x2
jax: 0.10.0
libtpu: 0.0.40
codegen_flags: <defaults>
</compile_context>

<pallas_src>
import functools

import jax
import jax.numpy as jnp
from jax.experimental import pallas as pl
from jax.experimental.pallas import tpu as pltpu


def _round_up(x, m):
    return ((x + m - 1) // m) * m


def _contrastive_tile_kernel(o1_ref, o2_ref, tgt_ref, out_ref, *, margin, eps):
    # o1_ref, o2_ref: (TB, D) in the inputs' native dtype (bf16 / f32 / ...)
    # tgt_ref:        (TB, 1) float32 (1.0 = same class, 0.0 = different)
    # out_ref:        (1, 1)  float32 partial loss sum for this tile
    o1 = o1_ref[...].astype(jnp.float32)                          # cast in-kernel
    o2 = o2_ref[...].astype(jnp.float32)
    diff = o2 - o1                                                # (TB, D)
    distances = jnp.sum(diff * diff, axis=1, keepdims=True)       # (TB, 1)
    t = tgt_ref[...]                                              # (TB, 1)
    hinge = jnp.maximum(margin - jnp.sqrt(distances + eps), 0.0)  # relu(m - sqrt(d+eps))
    losses = 0.5 * (t * distances + (1.0 - t) * hinge * hinge)    # (TB, 1)
    out_ref[...] = jnp.sum(losses, axis=0, keepdims=True)         # (1, 1)


def _pick_block_rows(batch, dim, itemsize):
    """Largest row tile keeping 2 inputs x 2 pipeline buffers <= ~8 MiB."""
    budget = 8 * 1024 * 1024
    tb = budget // max(1, 4 * dim * itemsize)   # 2 inputs * 2 buffers
    tb = max(8, (tb // 8) * 8)                  # sublane-aligned, >= 8
    tb = min(tb, 2048)                          # diminishing returns past this
    tb = min(tb, _round_up(batch, 8))           # don't exceed (padded) batch
    return tb


def contrastive_loss(output1, output2, target, *, margin, size_average=True,
                     block_rows=None):
    """Pallas implementation of ContrastiveLoss.forward."""
    assert output1.shape == output2.shape and output1.ndim == 2
    B, D = output1.shape

    # target.float() -> (B, 1) f32 column (tiny; cast here is negligible).
    tgt = target.astype(jnp.float32).reshape(B, 1)

    itemsize = jnp.dtype(output1.dtype).itemsize
    TB = block_rows or _pick_block_rows(B, D, itemsize)

    # Pad batch to a multiple of TB; padded rows (zeros, target=1) add 0 loss.
    Bp = _round_up(B, TB)
    if Bp != B:
        pad = Bp - B
        output1 = jnp.pad(output1, ((0, pad), (0, 0)))
        output2 = jnp.pad(output2, ((0, pad), (0, 0)))
        tgt = jnp.pad(tgt, ((0, pad), (0, 0)), constant_values=1.0)
    num_tiles = Bp // TB

    kernel = functools.partial(
        _contrastive_tile_kernel, margin=float(margin), eps=1e-9
    )

    partials = pl.pallas_call(
        kernel,
        out_shape=jax.ShapeDtypeStruct((num_tiles, 1), jnp.float32),
        grid_spec=pltpu.PrefetchScalarGridSpec(
            num_scalar_prefetch=0,
            grid=(num_tiles,),
            in_specs=[
                pl.BlockSpec((TB, D), lambda i: (i, 0)),   # output1 tile
                pl.BlockSpec((TB, D), lambda i: (i, 0)),   # output2 tile
                pl.BlockSpec((TB, 1), lambda i: (i, 0)),   # target tile
            ],
            out_specs=pl.BlockSpec((1, 1), lambda i: (i, 0)),
        ),
        compiler_params=pltpu.CompilerParams(
            dimension_semantics=("parallel",),
        ),
    )(output1, output2, tgt)

    total = jnp.sum(partials)
    inv_denom = (1.0 / float(B)) if size_average else 1.0
    return total * inv_denom


def _reference_loss(output1, output2, target, *, margin, size_average=True):
    eps = 1e-9
    o1 = output1.astype(jnp.float32)
    o2 = output2.astype(jnp.float32)
    distances = jnp.sum((o2 - o1) ** 2, axis=1)
    t = target.astype(jnp.float32)
    hinge = jnp.maximum(margin - jnp.sqrt(distances + eps), 0.0)
    losses = 0.5 * (t * distances + (1.0 - t) * hinge ** 2)
    return losses.mean() if size_average else losses.sum()


if __name__ == "__main__":
    margin = 1.0
    B, D = 8, 32  # small embedding pair batch

    key = jax.random.PRNGKey(0)
    k1, k2, k3 = jax.random.split(key, 3)
    output1 = jax.random.normal(k1, (B, D), dtype=jnp.float32)
    output2 = jax.random.normal(k2, (B, D), dtype=jnp.float32)
    target = jax.random.bernoulli(k3, p=0.5, shape=(B,)).astype(jnp.int32)

    loss = contrastive_loss(output1, output2, target, margin=margin,
                            size_average=True)
    loss = jax.block_until_ready(loss)

    ref = _reference_loss(output1, output2, target, margin=margin,
                          size_average=True)
    assert jnp.allclose(loss, ref, rtol=1e-5, atol=1e-6), (loss, ref)

    # also exercise sum reduction path
    loss_sum = jax.block_until_ready(
        contrastive_loss(output1, output2, target, margin=margin,
                         size_average=False))
    ref_sum = _reference_loss(output1, output2, target, margin=margin,
                              size_average=False)
    assert jnp.allclose(loss_sum, ref_sum, rtol=1e-5, atol=1e-6), (loss_sum, ref_sum)

    print("KERNEL_OK")
</pallas_src>

<mosaic_0001>
module attributes {stable_mosaic.version = 11 : i64} {
  func.func @_contrastive_tile_kernel(%arg0: i32, %arg1: memref<8x32xf32, #tpu.memory_space<vmem>>, %arg2: memref<8x32xf32, #tpu.memory_space<vmem>>, %arg3: memref<8x1xf32, #tpu.memory_space<vmem>>, %arg4: memref<1x1xf32, #tpu.memory_space<vmem>>) attributes {dimension_semantics = [#tpu.dimension_semantics<parallel>], iteration_bounds = array<i64: 1>, scalar_prefetch = 0 : i64, scratch_operands = 0 : i64, tpu.core_type = #tpu.core_type<tc>, window_params = [{transform_indices = @transform_0, window_bounds = array<i64: 8, 32>}, {transform_indices = @transform_1, window_bounds = array<i64: 8, 32>}, {transform_indices = @transform_2, window_bounds = array<i64: 8, 1>}, {transform_indices = @transform_3, window_bounds = array<i64: 1, 1>}]} {
    %c0 = arith.constant 0 : index
    %c0_0 = arith.constant 0 : index
    %0 = vector.load %arg1[%c0, %c0_0] : memref<8x32xf32, #tpu.memory_space<vmem>>, vector<8x32xf32>
    %c0_1 = arith.constant 0 : index
    %c0_2 = arith.constant 0 : index
    %1 = vector.load %arg2[%c0_1, %c0_2] : memref<8x32xf32, #tpu.memory_space<vmem>>, vector<8x32xf32>
    %2 = arith.subf %1, %0 : vector<8x32xf32>
    %3 = arith.mulf %2, %2 : vector<8x32xf32>
    %cst = arith.constant dense<0.000000e+00> : vector<8xf32>
    %4 = vector.multi_reduction <add>, %3, %cst [1] : vector<8x32xf32> to vector<8xf32>
    %5 = vector.shape_cast %4 : vector<8xf32> to vector<8x1xf32>
    %c0_3 = arith.constant 0 : index
    %c0_4 = arith.constant 0 : index
    %6 = vector.load %arg3[%c0_3, %c0_4] : memref<8x1xf32, #tpu.memory_space<vmem>>, vector<8x1xf32>
    %cst_5 = arith.constant 9.99999971E-10 : f32
    %7 = vector.broadcast %cst_5 : f32 to vector<8x1xf32>
    %8 = arith.addf %5, %7 : vector<8x1xf32>
    %9 = math.sqrt %8 : vector<8x1xf32>
    %cst_6 = arith.constant 1.000000e+00 : f32
    %10 = vector.broadcast %cst_6 : f32 to vector<8x1xf32>
    %11 = arith.subf %10, %9 : vector<8x1xf32>
    %cst_7 = arith.constant 0.000000e+00 : f32
    %12 = vector.broadcast %cst_7 : f32 to vector<8x1xf32>
    %13 = arith.maximumf %11, %12 : vector<8x1xf32>
    %14 = arith.mulf %6, %5 : vector<8x1xf32>
    %cst_8 = arith.constant 1.000000e+00 : f32
    %15 = vector.broadcast %cst_8 : f32 to vector<8x1xf32>
    %16 = arith.subf %15, %6 : vector<8x1xf32>
    %17 = arith.mulf %16, %13 : vector<8x1xf32>
    %18 = arith.mulf %17, %13 : vector<8x1xf32>
    %19 = arith.addf %14, %18 : vector<8x1xf32>
    %cst_9 = arith.constant 5.000000e-01 : f32
    %20 = vector.broadcast %cst_9 : f32 to vector<8x1xf32>
    %21 = arith.mulf %20, %19 : vector<8x1xf32>
    %cst_10 = arith.constant dense<0.000000e+00> : vector<1xf32>
    %22 = vector.multi_reduction <add>, %21, %cst_10 [0] : vector<8x1xf32> to vector<1xf32>
    %23 = vector.shape_cast %22 : vector<1xf32> to vector<1x1xf32>
    %c0_11 = arith.constant 0 : index
    %c0_12 = arith.constant 0 : index
    %24 = vector.load %arg4[%c0_11, %c0_12] : memref<1x1xf32, #tpu.memory_space<vmem>>, vector<1x1xf32>
    tpu.vector_store %arg4[%c0_11, %c0_12], %23 {strides = array<i32>} : memref<1x1xf32, #tpu.memory_space<vmem>>, vector<1x1xf32>,
    return
  }
  func.func @transform_0(%arg0: i32) -> (i32, i32) {
    %c0_i32 = arith.constant 0 : i32
    %c0_i32_0 = arith.constant 0 : i32
    return %arg0, %c0_i32 : i32, i32
  }
  func.func @transform_1(%arg0: i32) -> (i32, i32) {
    %c0_i32 = arith.constant 0 : i32
    %c0_i32_0 = arith.constant 0 : i32
    return %arg0, %c0_i32 : i32, i32
  }
  func.func @transform_2(%arg0: i32) -> (i32, i32) {
    %c0_i32 = arith.constant 0 : i32
    %c0_i32_0 = arith.constant 0 : i32
    return %arg0, %c0_i32 : i32, i32
  }
  func.func @transform_3(%arg0: i32) -> (i32, i32) {
    %c0_i32 = arith.constant 0 : i32
    %c0_i32_0 = arith.constant 0 : i32
    return %arg0, %c0_i32 : i32, i32
  }
}

</mosaic_0001>

<llo_original>
// kernel: tpu_custom_call.1
$region0: #{tpu_custom_call.1}
  #allocation0 [shape = 'u32[]', space=smem, size = 0x4, offset = 0x4, fixed_abs, tag = 'smem constant byte address 0x4 - core index']
  #allocation1 [shape = 'u32[72,128]{1,0:T(1,128)}', space=vmem, size = 0x9000, scoped, tag = 'internal scratch']
  %s0 = inlined_call_operand.vmem [shape: f32[8,32], index: 0, kind: input, shape index: {}]
  %s1 = inlined_call_operand.hbm [shape: f32[8,32], index: 1, kind: input, shape index: {}]
  %s2 = inlined_call_operand.vmem [shape: f32[8,1], index: 2, kind: input, shape index: {}]
  %s3 = inlined_call_operand.hbm [shape: f32[1,1], index: 3, kind: output, shape index: {}]
  %s4 = sld [smem:[#allocation0]]
  $region26: #{tpu_custom_call.1} parent=0
    _
  %s6 = ssub.s32 1, %s4
  %s7 = scalar_select 0, %s6, %s4
  $region1: #{tpu_custom_call.1} parent=0
    #allocation2 [shape = 'u8[4096]{0}', space=vmem, size = 0x1000, scoped, tag = 'input window, operand 1, single buffered']
    #allocation3 [shape = 's32[1]{0}', space=sflag, size = 0x4, scoped, tag = 'scoped memory for tpu_custom_call.1']
    #allocation4 [shape = 's32[1]{0}', space=sflag, size = 0x4, scoped, tag = 'scoped memory for tpu_custom_call.1']
    #allocation5 [shape = 'u8[512]{0}', space=vmem, size = 0x400, scoped, tag = 'output window, operand 0, single buffered']
    %8 = vsyncpa [#allocation3], 0
    %9 = vsyncpa [#allocation4], 0
    // Predicated region
    $region2: #{tpu_custom_call.1} parent=1 // pred_check
      _
    $region3: #{tpu_custom_call.1} parent=1 // pred_check_branch
      %11 = sbr.rel (0) target = $region5
    $region4: #{tpu_custom_call.1} parent=1 // pred_region
      _
    $region5: #{tpu_custom_call.1} parent=1 // pred_fallthru
      _
    // Predicated region
    $region6: #{tpu_custom_call.1} parent=1 // pred_check
      _
    $region7: #{tpu_custom_call.1} parent=1 // pred_check_branch
      %13 = sbr.rel (0) target = $region9
    $region8: #{tpu_custom_call.1} parent=1 // pred_region
      %15 = vsyncadd [#allocation3], 0
      %s17 = sshll.u32 %s1, 4
      %s18 = int_to_ptr.hbm [resolvable:$true] %s17
      %s19 = sshll.u32 [#allocation2], 4
      %s20 = int_to_ptr.vmem [resolvable:$true] %s19
      %22 = dma.hbm_to_vmem [thread:$0]  %s18, 128, %s20, [#allocation3]
    $region9: #{tpu_custom_call.1} parent=1 // pred_fallthru
      _
    // Predicated region
    $region10: #{tpu_custom_call.1} parent=1 // pred_check
      _
    $region11: #{tpu_custom_call.1} parent=1 // pred_check_branch
      %24 = sbr.rel (0) target = $region13
    $region12: #{tpu_custom_call.1} parent=1 // pred_region
      _
    $region13: #{tpu_custom_call.1} parent=1 // pred_fallthru
      _
    // Predicated region
    $region14: #{tpu_custom_call.1} parent=1 // pred_check
      _
    $region15: #{tpu_custom_call.1} parent=1 // pred_check_branch
      %26 = sbr.rel (0) target = $region17
    $region16: #{tpu_custom_call.1} parent=1 // pred_region
      %28 = dma.done [#allocation3], 128
    $region17: #{tpu_custom_call.1} parent=1 // pred_fallthru
      _
    %v29 = vld [vmem:[%s0] sm:$0xff]
    %v30 = vld [vmem:[#allocation2] sm:$0xff]
    %v31 = vsub.f32 %v30, %v29
    %v32 = vmul.f32 %v31, %v31
    %vm33 = vcmask 261120
    %v34 = vsel %vm33, %v32, 0.0
    %35 = vadd.xlane.f32.xlu0 %v34
    %v36 = vpop.xlane.xlu0 %35
    %v37 = vld [vmem:[%s2] sm:$0xff]
    %v38 = vadd.f32 %v36, 1e-09
    %v39 = vrsqrt.pop %v38
    %v40 = vmul.f32 %v39, %v38
    %v41 = vmul.f32 %v40, %v39
    %v42 = vmul.f32 0.5, %v41
    %v43 = vsub.f32 1.5, %v42
    %v44 = vmul.f32 %v39, %v43
    %v45 = vmul.f32 %v38, %v44
    %vm46 = vcmp.eq.f32.partialorder %v38, inf
    %v47 = vsel %vm46, %v38, %v45
    %vm48 = vcmp.eq.f32.partialorder %v38, 0.0
    %v49 = vand.u32 %v38, 2147483648
    %v50 = vsel %vm48, %v49, %v47
    %v51 = vsub.f32 1.0, %v50
    %v52 = vmax.f32 %v51, 0.0
    %v53 = vmul.f32 %v37, %v36
    %v54 = vsub.f32 1.0, %v37
    %v55 = vmul.f32 %v54, %v52
    %v56 = vmul.f32 %v55, %v52
    %v57 = vadd.f32 %v53, %v56
    %v58 = vmul.f32 %v57, 0.5
    %vm59 = vcmask 7168
    %v60 = vsel %vm59, %v58, 0.0
    %v61 = vrot.slane %v60, 4
    %v62 = vadd.f32 %v60, %v61
    %v63 = vrot.slane %v62, 2
    %v64 = vadd.f32 %v62, %v63
    %v65 = vrot.slane %v64, 1
    %v66 = vadd.f32 %v64, %v65
    %vm67 = vcmask 0
    %68 = vst.msk [vmem:[#allocation5] sm:$0x1] %vm67, %v66
    // Predicated region
    $region18: #{tpu_custom_call.1} parent=1 // pred_check
      _
    $region19: #{tpu_custom_call.1} parent=1 // pred_check_branch
      %70 = sbr.rel (0) target = $region21
    $region20: #{tpu_custom_call.1} parent=1 // pred_region
      %72 = vsyncadd [#allocation4], 0
      %s74 = sshll.u32 [#allocation5], 4
      %s75 = int_to_ptr.vmem [resolvable:$true] %s74
      %s76 = sshll.u32 %s3, 4
      %s77 = int_to_ptr.hbm [resolvable:$true] %s76
      %79 = dma.vmem_to_hbm [thread:$0]  %s75, 16, %s77, [#allocation4]
    $region21: #{tpu_custom_call.1} parent=1 // pred_fallthru
      _
    // Predicated region
    $region22: #{tpu_custom_call.1} parent=1 // pred_check
      _
    $region23: #{tpu_custom_call.1} parent=1 // pred_check_branch
      %81 = sbr.rel (0) target = $region25
    $region24: #{tpu_custom_call.1} parent=1 // pred_region
      %83 = dma.done [#allocation4], 16
    $region25: #{tpu_custom_call.1} parent=1 // pred_fallthru
      _
    %84 = vsyncpa [#allocation3], 1
    %85 = vsyncpa [#allocation4], 1

</llo_original>
